<compile_context>
chip_gen: v6e
topology: v6e:2x2x1
jax: 0.10.0
libtpu: 0.0.40
codegen_flags: <defaults>
</compile_context>

<pallas_src>
import jax
import jax.numpy as jnp
from jax.experimental import pallas as pl
from jax.experimental.pallas import tpu as pltpu


def _round_up(x, m):
    return (x + m - 1) // m * m


def _mlp_kernel(x_ref, w1_ref, b1_ref, w2_ref, b2_ref, w3_ref, b3_ref, o_ref):
    x = x_ref[...]  # (TM, Dp) bf16

    # video_encoder[0]: Linear + ReLU
    h1 = jnp.dot(x, w1_ref[...], preferred_element_type=jnp.float32) + b1_ref[...]
    h1 = jnp.maximum(h1, 0.0).astype(jnp.bfloat16)

    # video_encoder[2]: Linear (no activation)
    h2 = jnp.dot(h1, w2_ref[...], preferred_element_type=jnp.float32) + b2_ref[...]
    h2 = h2.astype(jnp.bfloat16)

    # classifier: Linear
    logits = jnp.dot(h2, w3_ref[...], preferred_element_type=jnp.float32) + b3_ref[...]

    o_ref[...] = logits.astype(o_ref.dtype)


def _vmem_bytes(tm, dp, hp, cp):
    # Double-buffered x tile + output tile, weights/biases (also double-buffered
    # by the pipeline even though their index maps are constant), plus f32
    # intermediates of shape (tm, hp).
    io = 2 * (tm * dp * 2 + tm * cp * 4)
    weights = 2 * 2 * (dp * hp + hp * hp + hp * cp)
    biases = 2 * 4 * (hp + hp + cp)
    interm = 2 * tm * hp * 4
    return io + weights + biases + interm


def custom_model_forward(video, params, *, block_rows=512):
    """video: (B, video_dim) f32. params: dict of w1,b1,w2,b2,w3,b3 (f32)."""
    B, D = video.shape
    H = params["w1"].shape[1]
    C = params["w3"].shape[1]

    LANE = 128
    Dp = _round_up(D, LANE)
    Hp = _round_up(H, LANE)
    Cp = _round_up(C, LANE)

    # Batch tile: as large as fits a conservative VMEM budget (amortizes the
    # ~0.35 us per-grid-step overhead); small B just rounds up to sublanes.
    VMEM_BUDGET = 48 << 20
    TM = min(block_rows, _round_up(B, 8))
    while TM > 8 and _vmem_bytes(TM, Dp, Hp, Cp) > VMEM_BUDGET:
        TM //= 2
    TM = max(TM, 8)
    Bp = _round_up(B, TM)

    # Pad + cast operands (zero padding leaves valid outputs unchanged).
    bf16 = jnp.bfloat16
    x_p = jnp.zeros((Bp, Dp), bf16).at[:B, :D].set(video.astype(bf16))
    w1_p = jnp.zeros((Dp, Hp), bf16).at[:D, :H].set(params["w1"].astype(bf16))
    w2_p = jnp.zeros((Hp, Hp), bf16).at[:H, :H].set(params["w2"].astype(bf16))
    w3_p = jnp.zeros((Hp, Cp), bf16).at[:H, :C].set(params["w3"].astype(bf16))
    b1_p = jnp.zeros((1, Hp), jnp.float32).at[:, :H].set(params["b1"])
    b2_p = jnp.zeros((1, Hp), jnp.float32).at[:, :H].set(params["b2"])
    b3_p = jnp.zeros((1, Cp), jnp.float32).at[:, :C].set(params["b3"])

    flops = 2 * Bp * (Dp * Hp + Hp * Hp + Hp * Cp)
    bytes_accessed = (
        (x_p.size + w1_p.size + w2_p.size + w3_p.size) * 2   # bf16 operands
        + (b1_p.size + b2_p.size + b3_p.size) * 4             # f32 biases
        + Bp * Cp * 4                                          # f32 output
    )

    # Raise scoped VMEM only if the working set needs it; cap at 64 MiB (v7x).
    vmem_needed = _vmem_bytes(TM, Dp, Hp, Cp)
    vmem_limit = min(max(vmem_needed * 5 // 4, 32 << 20), 64 << 20)

    out_p = pl.pallas_call(
        _mlp_kernel,
        out_shape=jax.ShapeDtypeStruct((Bp, Cp), jnp.float32),
        grid=(Bp // TM,),
        in_specs=[
            pl.BlockSpec((TM, Dp), lambda i: (i, 0)),   # x: batch-tiled
            pl.BlockSpec((Dp, Hp), lambda i: (0, 0)),   # w1: resident
            pl.BlockSpec((1, Hp), lambda i: (0, 0)),    # b1
            pl.BlockSpec((Hp, Hp), lambda i: (0, 0)),   # w2: resident
            pl.BlockSpec((1, Hp), lambda i: (0, 0)),    # b2
            pl.BlockSpec((Hp, Cp), lambda i: (0, 0)),   # w3: resident
            pl.BlockSpec((1, Cp), lambda i: (0, 0)),    # b3
        ],
        out_specs=pl.BlockSpec((TM, Cp), lambda i: (i, 0)),
        compiler_params=pltpu.CompilerParams(
            dimension_semantics=("parallel",),
            vmem_limit_bytes=int(vmem_limit)),
        cost_estimate=pl.CostEstimate(
            flops=flops, transcendentals=0, bytes_accessed=bytes_accessed),
    )(x_p, w1_p, b1_p, w2_p, b2_p, w3_p, b3_p)

    # Slice away lane/batch padding.
    return out_p[:B, :C]


def init_params(key, video_dim, hidden_dim, num_classes):
    """Deterministic init mimicking nn.Linear (uniform +/- 1/sqrt(fan_in))."""
    ks = jax.random.split(key, 6)

    def linear(kw, kb, fan_in, fan_out):
        bound = 1.0 / jnp.sqrt(fan_in)
        w = jax.random.uniform(kw, (fan_in, fan_out), jnp.float32, -bound, bound)
        b = jax.random.uniform(kb, (1, fan_out), jnp.float32, -bound, bound)
        return w, b

    w1, b1 = linear(ks[0], ks[1], video_dim, hidden_dim)
    w2, b2 = linear(ks[2], ks[3], hidden_dim, hidden_dim)
    w3, b3 = linear(ks[4], ks[5], hidden_dim, num_classes)
    return {"w1": w1, "b1": b1, "w2": w2, "b2": b2, "w3": w3, "b3": b3}


if __name__ == "__main__":
    B, VIDEO_DIM, HIDDEN_DIM, NUM_CLASSES = 8, 64, 32, 10

    key = jax.random.PRNGKey(0)
    k_x, k_p = jax.random.split(key)

    video = jax.random.normal(k_x, (B, VIDEO_DIM), jnp.float32)
    params = init_params(k_p, VIDEO_DIM, HIDDEN_DIM, NUM_CLASSES)

    fwd = jax.jit(custom_model_forward)
    logits = fwd(video, params)
    jax.block_until_ready(logits)
    assert logits.shape == (B, NUM_CLASSES)

    # Reference in plain JAX with the same bf16 operand casts / f32 accumulation.
    bf16 = jnp.bfloat16
    h1 = jnp.maximum(
        jnp.dot(video.astype(bf16), params["w1"].astype(bf16),
                preferred_element_type=jnp.float32) + params["b1"], 0.0).astype(bf16)
    h2 = (jnp.dot(h1, params["w2"].astype(bf16),
                  preferred_element_type=jnp.float32) + params["b2"]).astype(bf16)
    ref = jnp.dot(h2, params["w3"].astype(bf16),
                  preferred_element_type=jnp.float32) + params["b3"]

    assert jnp.allclose(logits, ref, atol=1e-3, rtol=1e-3), (
        float(jnp.max(jnp.abs(logits - ref))))

    print("KERNEL_OK")
</pallas_src>

<mosaic_0001>
module attributes {stable_mosaic.version = 11 : i64} {
  func.func @_mlp_kernel(%arg0: i32, %arg1: memref<8x128xbf16, #tpu.memory_space<vmem>>, %arg2: memref<128x128xbf16, #tpu.memory_space<vmem>>, %arg3: memref<1x128xf32, #tpu.memory_space<vmem>>, %arg4: memref<128x128xbf16, #tpu.memory_space<vmem>>, %arg5: memref<1x128xf32, #tpu.memory_space<vmem>>, %arg6: memref<128x128xbf16, #tpu.memory_space<vmem>>, %arg7: memref<1x128xf32, #tpu.memory_space<vmem>>, %arg8: memref<8x128xf32, #tpu.memory_space<vmem>>) attributes {dimension_semantics = [#tpu.dimension_semantics<parallel>], iteration_bounds = array<i64: 1>, scalar_prefetch = 0 : i64, scratch_operands = 0 : i64, tpu.core_type = #tpu.core_type<tc>, window_params = [{transform_indices = @transform_0, window_bounds = array<i64: 8, 128>}, {pipeline_mode = #tpu.pipeline_mode<synchronous>, transform_indices = @transform_1, window_bounds = array<i64: 128, 128>}, {pipeline_mode = #tpu.pipeline_mode<synchronous>, transform_indices = @transform_2, window_bounds = array<i64: 1, 128>}, {pipeline_mode = #tpu.pipeline_mode<synchronous>, transform_indices = @transform_3, window_bounds = array<i64: 128, 128>}, {pipeline_mode = #tpu.pipeline_mode<synchronous>, transform_indices = @transform_4, window_bounds = array<i64: 1, 128>}, {pipeline_mode = #tpu.pipeline_mode<synchronous>, transform_indices = @transform_5, window_bounds = array<i64: 128, 128>}, {pipeline_mode = #tpu.pipeline_mode<synchronous>, transform_indices = @transform_6, window_bounds = array<i64: 1, 128>}, {transform_indices = @transform_7, window_bounds = array<i64: 8, 128>}]} {
    %c0 = arith.constant 0 : index
    %c0_0 = arith.constant 0 : index
    %0 = vector.load %arg1[%c0, %c0_0] : memref<8x128xbf16, #tpu.memory_space<vmem>>, vector<8x128xbf16>
    %c0_1 = arith.constant 0 : index
    %c0_2 = arith.constant 0 : index
    %1 = vector.load %arg2[%c0_1, %c0_2] : memref<128x128xbf16, #tpu.memory_space<vmem>>, vector<128x128xbf16>
    %cst = arith.constant dense<0.000000e+00> : vector<8x128xf32>
    %2 = tpu.matmul %0, %1, %cst {dimension_numbers = #tpu.dot_dimension_numbers<[1], [0], [0], [1], [0, 0, 1, 1], [], []>} : vector<8x128xbf16>, vector<128x128xbf16>, vector<8x128xf32> -> vector<8x128xf32>
    %c0_3 = arith.constant 0 : index
    %c0_4 = arith.constant 0 : index
    %3 = vector.load %arg3[%c0_3, %c0_4] : memref<1x128xf32, #tpu.memory_space<vmem>>, vector<1x128xf32>
    %4 = vector.broadcast %3 : vector<1x128xf32> to vector<8x128xf32>
    %5 = arith.addf %2, %4 : vector<8x128xf32>
    %cst_5 = arith.constant 0.000000e+00 : f32
    %6 = vector.broadcast %cst_5 : f32 to vector<8x128xf32>
    %7 = arith.maximumf %5, %6 : vector<8x128xf32>
    %8 = arith.truncf %7 : vector<8x128xf32> to vector<8x128xbf16>
    %c0_6 = arith.constant 0 : index
    %c0_7 = arith.constant 0 : index
    %9 = vector.load %arg4[%c0_6, %c0_7] : memref<128x128xbf16, #tpu.memory_space<vmem>>, vector<128x128xbf16>
    %cst_8 = arith.constant dense<0.000000e+00> : vector<8x128xf32>
    %10 = tpu.matmul %8, %9, %cst_8 {dimension_numbers = #tpu.dot_dimension_numbers<[1], [0], [0], [1], [0, 0, 1, 1], [], []>} : vector<8x128xbf16>, vector<128x128xbf16>, vector<8x128xf32> -> vector<8x128xf32>
    %c0_9 = arith.constant 0 : index
    %c0_10 = arith.constant 0 : index
    %11 = vector.load %arg5[%c0_9, %c0_10] : memref<1x128xf32, #tpu.memory_space<vmem>>, vector<1x128xf32>
    %12 = vector.broadcast %11 : vector<1x128xf32> to vector<8x128xf32>
    %13 = arith.addf %10, %12 : vector<8x128xf32>
    %14 = arith.truncf %13 : vector<8x128xf32> to vector<8x128xbf16>
    %c0_11 = arith.constant 0 : index
    %c0_12 = arith.constant 0 : index
    %15 = vector.load %arg6[%c0_11, %c0_12] : memref<128x128xbf16, #tpu.memory_space<vmem>>, vector<128x128xbf16>
    %cst_13 = arith.constant dense<0.000000e+00> : vector<8x128xf32>
    %16 = tpu.matmul %14, %15, %cst_13 {dimension_numbers = #tpu.dot_dimension_numbers<[1], [0], [0], [1], [0, 0, 1, 1], [], []>} : vector<8x128xbf16>, vector<128x128xbf16>, vector<8x128xf32> -> vector<8x128xf32>
    %c0_14 = arith.constant 0 : index
    %c0_15 = arith.constant 0 : index
    %17 = vector.load %arg7[%c0_14, %c0_15] : memref<1x128xf32, #tpu.memory_space<vmem>>, vector<1x128xf32>
    %18 = vector.broadcast %17 : vector<1x128xf32> to vector<8x128xf32>
    %19 = arith.addf %16, %18 : vector<8x128xf32>
    %c0_16 = arith.constant 0 : index
    %c0_17 = arith.constant 0 : index
    %20 = vector.load %arg8[%c0_16, %c0_17] : memref<8x128xf32, #tpu.memory_space<vmem>>, vector<8x128xf32>
    tpu.vector_store %arg8[%c0_16, %c0_17], %19 {strides = array<i32>} : memref<8x128xf32, #tpu.memory_space<vmem>>, vector<8x128xf32>,
    return
  }
  func.func @transform_0(%arg0: i32) -> (i32, i32) {
    %c0_i32 = arith.constant 0 : i32
    %c0_i32_0 = arith.constant 0 : i32
    return %arg0, %c0_i32 : i32, i32
  }
  func.func @transform_1(%arg0: i32) -> (i32, i32) {
    %c0_i32 = arith.constant 0 : i32
    %c0_i32_0 = arith.constant 0 : i32
    %c0_i32_1 = arith.constant 0 : i32
    return %c0_i32, %c0_i32_0 : i32, i32
  }
  func.func @transform_2(%arg0: i32) -> (i32, i32) {
    %c0_i32 = arith.constant 0 : i32
    %c0_i32_0 = arith.constant 0 : i32
    %c0_i32_1 = arith.constant 0 : i32
    return %c0_i32, %c0_i32_0 : i32, i32
  }
  func.func @transform_3(%arg0: i32) -> (i32, i32) {
    %c0_i32 = arith.constant 0 : i32
    %c0_i32_0 = arith.constant 0 : i32
    %c0_i32_1 = arith.constant 0 : i32
    return %c0_i32, %c0_i32_0 : i32, i32
  }
  func.func @transform_4(%arg0: i32) -> (i32, i32) {
    %c0_i32 = arith.constant 0 : i32
    %c0_i32_0 = arith.constant 0 : i32
    %c0_i32_1 = arith.constant 0 : i32
    return %c0_i32, %c0_i32_0 : i32, i32
  }
  func.func @transform_5(%arg0: i32) -> (i32, i32) {
    %c0_i32 = arith.constant 0 : i32
    %c0_i32_0 = arith.constant 0 : i32
    %c0_i32_1 = arith.constant 0 : i32
    return %c0_i32, %c0_i32_0 : i32, i32
  }
  func.func @transform_6(%arg0: i32) -> (i32, i32) {
    %c0_i32 = arith.constant 0 : i32
    %c0_i32_0 = arith.constant 0 : i32
    %c0_i32_1 = arith.constant 0 : i32
    return %c0_i32, %c0_i32_0 : i32, i32
  }
  func.func @transform_7(%arg0: i32) -> (i32, i32) {
    %c0_i32 = arith.constant 0 : i32
    %c0_i32_0 = arith.constant 0 : i32
    return %arg0, %c0_i32 : i32, i32
  }
}

</mosaic_0001>

<llo_original>
// kernel: custom_model_forward.1
$region0: #{custom_model_forward.1}
  #allocation0 [shape = 'u32[]', space=smem, size = 0x4, offset = 0x4, fixed_abs, tag = 'smem constant byte address 0x4 - core index']
  #allocation1 [shape = 'u32[144,128]{1,0:T(1,128)}', space=vmem, size = 0x12000, scoped, tag = 'internal scratch']
  %s0 = inlined_call_operand.vmem [shape: bf16[8,128], index: 0, kind: input, shape index: {}]
  %s1 = inlined_call_operand.vmem [shape: bf16[128,128], index: 1, kind: input, shape index: {}]
  %s2 = inlined_call_operand.vmem [shape: f32[1,128], index: 2, kind: input, shape index: {}]
  %s3 = inlined_call_operand.vmem [shape: bf16[128,128], index: 3, kind: input, shape index: {}]
  %s4 = inlined_call_operand.vmem [shape: f32[1,128], index: 4, kind: input, shape index: {}]
  %s5 = inlined_call_operand.vmem [shape: bf16[128,128], index: 5, kind: input, shape index: {}]
  %s6 = inlined_call_operand.vmem [shape: f32[1,128], index: 6, kind: input, shape index: {}]
  %s7 = inlined_call_operand.hbm [shape: f32[8,128], index: 7, kind: output, shape index: {}]
  %s8 = sld [smem:[#allocation0]]
  $region38: #{custom_model_forward.1} parent=0
    _
  %s10 = ssub.s32 1, %s8
  %s11 = scalar_select 0, %s10, %s8
  $region1: #{custom_model_forward.1} parent=0
    #allocation2 [shape = 'u8[4096]{0}', space=vmem, size = 0x1000, scoped, tag = 'output window, operand 0, single buffered']
    #allocation3 [shape = 's32[1]{0}', space=sflag, size = 0x4, scoped, tag = 'scoped memory for custom_model_forward.1']
    %12 = vsyncpa [#allocation3], 0
    // Predicated region
    $region2: #{custom_model_forward.1} parent=1 // pred_check
      _
    $region3: #{custom_model_forward.1} parent=1 // pred_check_branch
      %14 = sbr.rel (0) target = $region5
    $region4: #{custom_model_forward.1} parent=1 // pred_region
      _
    $region5: #{custom_model_forward.1} parent=1 // pred_fallthru
      _
    // Predicated region
    $region6: #{custom_model_forward.1} parent=1 // pred_check
      _
    $region7: #{custom_model_forward.1} parent=1 // pred_check_branch
      %16 = sbr.rel (0) target = $region9
    $region8: #{custom_model_forward.1} parent=1 // pred_region
      _
    $region9: #{custom_model_forward.1} parent=1 // pred_fallthru
      _
    // Predicated region
    $region10: #{custom_model_forward.1} parent=1 // pred_check
      _
    $region11: #{custom_model_forward.1} parent=1 // pred_check_branch
      %18 = sbr.rel (0) target = $region13
    $region12: #{custom_model_forward.1} parent=1 // pred_region
      _
    $region13: #{custom_model_forward.1} parent=1 // pred_fallthru
      _
    // Predicated region
    $region14: #{custom_model_forward.1} parent=1 // pred_check
      _
    $region15: #{custom_model_forward.1} parent=1 // pred_check_branch
      %20 = sbr.rel (0) target = $region17
    $region16: #{custom_model_forward.1} parent=1 // pred_region
      _
    $region17: #{custom_model_forward.1} parent=1 // pred_fallthru
      _
    // Predicated region
    $region18: #{custom_model_forward.1} parent=1 // pred_check
      _
    $region19: #{custom_model_forward.1} parent=1 // pred_check_branch
      %22 = sbr.rel (0) target = $region21
    $region20: #{custom_model_forward.1} parent=1 // pred_region
      _
    $region21: #{custom_model_forward.1} parent=1 // pred_fallthru
      _
    // Predicated region
    $region22: #{custom_model_forward.1} parent=1 // pred_check
      _
    $region23: #{custom_model_forward.1} parent=1 // pred_check_branch
      %24 = sbr.rel (0) target = $region25
    $region24: #{custom_model_forward.1} parent=1 // pred_region
      _
    $region25: #{custom_model_forward.1} parent=1 // pred_fallthru
      _
    // Predicated region
    $region26: #{custom_model_forward.1} parent=1 // pred_check
      _
    $region27: #{custom_model_forward.1} parent=1 // pred_check_branch
      %26 = sbr.rel (0) target = $region29
    $region28: #{custom_model_forward.1} parent=1 // pred_region
      _
    $region29: #{custom_model_forward.1} parent=1 // pred_fallthru
      _
    %v28 = vld [vmem:[%s0] sm:$0xf]
    %v29 = vld [vmem:[%s1] sm:$0xf]
    %v30 = vld [vmem:[%s1 + $0x4] sm:$0xf]
    %v31 = vld [vmem:[%s1 + $0x8] sm:$0xf]
    %v32 = vld [vmem:[%s1 + $0xc] sm:$0xf]
    %v33 = vld [vmem:[%s1 + $0x10] sm:$0xf]
    %v34 = vld [vmem:[%s1 + $0x14] sm:$0xf]
    %v35 = vld [vmem:[%s1 + $0x18] sm:$0xf]
    %v36 = vld [vmem:[%s1 + $0x1c] sm:$0xf]
    %v37 = vld [vmem:[%s1 + $0x20] sm:$0xf]
    %v38 = vld [vmem:[%s1 + $0x24] sm:$0xf]
    %v39 = vld [vmem:[%s1 + $0x28] sm:$0xf]
    %v40 = vld [vmem:[%s1 + $0x2c] sm:$0xf]
    %v41 = vld [vmem:[%s1 + $0x30] sm:$0xf]
    %v42 = vld [vmem:[%s1 + $0x34] sm:$0xf]
    %v43 = vld [vmem:[%s1 + $0x38] sm:$0xf]
    %v44 = vld [vmem:[%s1 + $0x3c] sm:$0xf]
    %v45 = vld [vmem:[%s2] sm:$0x1]
    %v47 = vlaneseq
    %v48 = vshrl.u32 %v47, 7
    %v49 = vsub.s32 0, %v48
    %v50 = vrot.slane %v45, %v49
    %v68 = vunpack.c.l.b16 %v29
    %v69 = vunpack.c.l.b16 %v30
    %v70 = vunpack.c.l.b16 %v31
    %v71 = vunpack.c.l.b16 %v32
    %v72 = vunpack.c.l.b16 %v33
    %v73 = vunpack.c.l.b16 %v34
    %v74 = vunpack.c.l.b16 %v35
    %v75 = vunpack.c.l.b16 %v36
    %v76 = vunpack.c.l.b16 %v37
    %v77 = vunpack.c.l.b16 %v38
    %v78 = vunpack.c.l.b16 %v39
    %v79 = vunpack.c.l.b16 %v40
    %v80 = vunpack.c.l.b16 %v41
    %v81 = vunpack.c.l.b16 %v42
    %v82 = vunpack.c.l.b16 %v43
    %v83 = vunpack.c.l.b16 %v44
    %v84 = vpack.c.b16 %v69, %v68
    %v85 = vpack.c.b16 %v71, %v70
    %v86 = vpack.c.b16 %v73, %v72
    %v87 = vpack.c.b16 %v75, %v74
    %v88 = vpack.c.b16 %v77, %v76
    %v89 = vpack.c.b16 %v79, %v78
    %v90 = vpack.c.b16 %v81, %v80
    %v91 = vpack.c.b16 %v83, %v82
    %100 = vmatprep.subr.bf16.mxu0 0
    %101 = vmatpush1.bf16.msra.mxu0 %v91
    %102 = vmatprep.subr.bf16.mxu0 0
    %103 = vmatpush1.bf16.msra.mxu0 %v90
    %104 = vmatprep.subr.bf16.mxu0 0
    %105 = vmatpush1.bf16.msra.mxu0 %v89
    %106 = vmatprep.subr.bf16.mxu0 0
    %107 = vmatpush1.bf16.msra.mxu0 %v88
    %108 = vmatprep.subr.bf16.mxu0 0
    %109 = vmatpush1.bf16.msra.mxu0 %v87
    %110 = vmatprep.subr.bf16.mxu0 0
    %111 = vmatpush1.bf16.msra.mxu0 %v86
    %112 = vmatprep.subr.bf16.mxu0 0
    %113 = vmatpush1.bf16.msra.mxu0 %v85
    %114 = vmatprep.subr.bf16.mxu0 0
    %115 = vmatpush1.bf16.msra.mxu0 %v84
    %116 = vmatprep.subr.bf16.mxu0 0
    %117 = vmatpush2.bf16.msra.mxu0 0
    %118 = vmatprep.subr.bf16.mxu0 0
    %119 = vmatpush2.bf16.msra.mxu0 0
    %120 = vmatprep.subr.bf16.mxu0 0
    %121 = vmatpush2.bf16.msra.mxu0 0
    %122 = vmatprep.subr.bf16.mxu0 0
    %123 = vmatpush2.bf16.msra.mxu0 0
    %124 = vmatprep.subr.bf16.mxu0 0
    %125 = vmatpush2.bf16.msra.mxu0 0
    %126 = vmatprep.subr.bf16.mxu0 0
    %127 = vmatpush2.bf16.msra.mxu0 0
    %128 = vmatprep.subr.bf16.mxu0 0
    %129 = vmatpush2.bf16.msra.mxu0 0
    %130 = vmatprep.subr.bf16.mxu0 0
    %131 = vmatpush2.bf16.msra.mxu0 0
    %132 = vmatprep.mubr.bf16.mxu0 0
    %133 = vmatmul.mubr.bf16.gmra.mxu0 %v28
    %v134 = vpop.f32.mrf.mxu0
    %v135 = vadd.f32 %v50, %v134
    %v136 = vpop.f32.mrf.mxu0
    %v137 = vpop.f32.mrf.mxu0
    %v138 = vpop.f32.mrf.mxu0
    %139 = vdwg.mxu0
    %v140 = vmax.f32 %v135, 0.0
    %v141 = vpack.c.bf16 %v140, %v140
    %v142 = vld [vmem:[%s3] sm:$0xf]
    %v143 = vld [vmem:[%s3 + $0x4] sm:$0xf]
    %v144 = vld [vmem:[%s3 + $0x8] sm:$0xf]
    %v145 = vld [vmem:[%s3 + $0xc] sm:$0xf]
    %v146 = vld [vmem:[%s3 + $0x10] sm:$0xf]
    %v147 = vld [vmem:[%s3 + $0x14] sm:$0xf]
    %v148 = vld [vmem:[%s3 + $0x18] sm:$0xf]
    %v149 = vld [vmem:[%s3 + $0x1c] sm:$0xf]
    %v150 = vld [vmem:[%s3 + $0x20] sm:$0xf]
    %v151 = vld [vmem:[%s3 + $0x24] sm:$0xf]
    %v152 = vld [vmem:[%s3 + $0x28] sm:$0xf]
    %v153 = vld [vmem:[%s3 + $0x2c] sm:$0xf]
    %v154 = vld [vmem:[%s3 + $0x30] sm:$0xf]
    %v155 = vld [vmem:[%s3 + $0x34] sm:$0xf]
    %v156 = vld [vmem:[%s3 + $0x38] sm:$0xf]
    %v157 = vld [vmem:[%s3 + $0x3c] sm:$0xf]
    %v158 = vld [vmem:[%s4] sm:$0x1]
    %v160 = vlaneseq
    %v161 = vshrl.u32 %v160, 7
    %v162 = vsub.s32 0, %v161
    %v163 = vrot.slane %v158, %v162
    %v181 = vunpack.c.l.b16 %v142
    %v182 = vunpack.c.l.b16 %v143
    %v183 = vunpack.c.l.b16 %v144
    %v184 = vunpack.c.l.b16 %v145
    %v185 = vunpack.c.l.b16 %v146
    %v186 = vunpack.c.l.b16 %v147
    %v187 = vunpack.c.l.b16 %v148
    %v188 = vunpack.c.l.b16 %v149
    %v189 = vunpack.c.l.b16 %v150
    %v190 = vunpack.c.l.b16 %v151
    %v191 = vunpack.c.l.b16 %v152
    %v192 = vunpack.c.l.b16 %v153
    %v193 = vunpack.c.l.b16 %v154
    %v194 = vunpack.c.l.b16 %v155
    %v195 = vunpack.c.l.b16 %v156
    %v196 = vunpack.c.l.b16 %v157
    %v197 = vpack.c.b16 %v182, %v181
    %v198 = vpack.c.b16 %v184, %v183
    %v199 = vpack.c.b16 %v186, %v185
    %v200 = vpack.c.b16 %v188, %v187
    %v201 = vpack.c.b16 %v190, %v189
    %v202 = vpack.c.b16 %v192, %v191
    %v203 = vpack.c.b16 %v194, %v193
    %v204 = vpack.c.b16 %v196, %v195
    %213 = vmatprep.subr.bf16.mxu0 0
    %214 = vmatpush1.bf16.msra.mxu0 %v204
    %215 = vmatprep.subr.bf16.mxu0 0
    %216 = vmatpush1.bf16.msra.mxu0 %v203
    %217 = vmatprep.subr.bf16.mxu0 0
    %218 = vmatpush1.bf16.msra.mxu0 %v202
    %219 = vmatprep.subr.bf16.mxu0 0
    %220 = vmatpush1.bf16.msra.mxu0 %v201
    %221 = vmatprep.subr.bf16.mxu0 0
    %222 = vmatpush1.bf16.msra.mxu0 %v200
    %223 = vmatprep.subr.bf16.mxu0 0
    %224 = vmatpush1.bf16.msra.mxu0 %v199
    %225 = vmatprep.subr.bf16.mxu0 0
    %226 = vmatpush1.bf16.msra.mxu0 %v198
    %227 = vmatprep.subr.bf16.mxu0 0
    %228 = vmatpush1.bf16.msra.mxu0 %v197
    %229 = vmatprep.subr.bf16.mxu0 0
    %230 = vmatpush2.bf16.msra.mxu0 0
    %231 = vmatprep.subr.bf16.mxu0 0
    %232 = vmatpush2.bf16.msra.mxu0 0
    %233 = vmatprep.subr.bf16.mxu0 0
    %234 = vmatpush2.bf16.msra.mxu0 0
    %235 = vmatprep.subr.bf16.mxu0 0
    %236 = vmatpush2.bf16.msra.mxu0 0
    %237 = vmatprep.subr.bf16.mxu0 0
    %238 = vmatpush2.bf16.msra.mxu0 0
    %239 = vmatprep.subr.bf16.mxu0 0
    %240 = vmatpush2.bf16.msra.mxu0 0
    %241 = vmatprep.subr.bf16.mxu0 0
    %242 = vmatpush2.bf16.msra.mxu0 0
    %243 = vmatprep.subr.bf16.mxu0 0
    %244 = vmatpush2.bf16.msra.mxu0 0
    %245 = vmatprep.mubr.bf16.mxu0 0
    %246 = vmatmul.mubr.bf16.gmra.mxu0 %v141
    %v247 = vpop.f32.mrf.mxu0
    %v248 = vadd.f32 %v163, %v247
    %v249 = vpop.f32.mrf.mxu0
    %v250 = vpop.f32.mrf.mxu0
    %v251 = vpop.f32.mrf.mxu0
    %252 = vdwg.mxu0
    %v253 = vpack.c.bf16 %v248, %v248
    %v254 = vld [vmem:[%s5] sm:$0xf]
    %v255 = vld [vmem:[%s5 + $0x4] sm:$0xf]
    %v256 = vld [vmem:[%s5 + $0x8] sm:$0xf]
    %v257 = vld [vmem:[%s5 + $0xc] sm:$0xf]
    %v258 = vld [vmem:[%s5 + $0x10] sm:$0xf]
    %v259 = vld [vmem:[%s5 + $0x14] sm:$0xf]
    %v260 = vld [vmem:[%s5 + $0x18] sm:$0xf]
    %v261 = vld [vmem:[%s5 + $0x1c] sm:$0xf]
    %v262 = vld [vmem:[%s5 + $0x20] sm:$0xf]
    %v263 = vld [vmem:[%s5 + $0x24] sm:$0xf]
    %v264 = vld [vmem:[%s5 + $0x28] sm:$0xf]
    %v265 = vld [vmem:[%s5 + $0x2c] sm:$0xf]
    %v266 = vld [vmem:[%s5 + $0x30] sm:$0xf]
    %v267 = vld [vmem:[%s5 + $0x34] sm:$0xf]
    %v268 = vld [vmem:[%s5 + $0x38] sm:$0xf]
    %v269 = vld [vmem:[%s5 + $0x3c] sm:$0xf]
    %v270 = vld [vmem:[%s6] sm:$0x1]
    %v272 = vlaneseq
    %v273 = vshrl.u32 %v272, 7
    %v274 = vsub.s32 0, %v273
    %v275 = vrot.slane %v270, %v274
    %v293 = vunpack.c.l.b16 %v254
    %v294 = vunpack.c.l.b16 %v255
    %v295 = vunpack.c.l.b16 %v256
    %v296 = vunpack.c.l.b16 %v257
    %v297 = vunpack.c.l.b16 %v258
    %v298 = vunpack.c.l.b16 %v259
    %v299 = vunpack.c.l.b16 %v260
    %v300 = vunpack.c.l.b16 %v261
    %v301 = vunpack.c.l.b16 %v262
    %v302 = vunpack.c.l.b16 %v263
    %v303 = vunpack.c.l.b16 %v264
    %v304 = vunpack.c.l.b16 %v265
    %v305 = vunpack.c.l.b16 %v266
    %v306 = vunpack.c.l.b16 %v267
    %v307 = vunpack.c.l.b16 %v268
    %v308 = vunpack.c.l.b16 %v269
    %v309 = vpack.c.b16 %v294, %v293
    %v310 = vpack.c.b16 %v296, %v295
    %v311 = vpack.c.b16 %v298, %v297
    %v312 = vpack.c.b16 %v300, %v299
    %v313 = vpack.c.b16 %v302, %v301
    %v314 = vpack.c.b16 %v304, %v303
    %v315 = vpack.c.b16 %v306, %v305
    %v316 = vpack.c.b16 %v308, %v307
    %325 = vmatprep.subr.bf16.mxu0 0
    %326 = vmatpush1.bf16.msra.mxu0 %v316
    %327 = vmatprep.subr.bf16.mxu0 0
    %328 = vmatpush1.bf16.msra.mxu0 %v315
    %329 = vmatprep.subr.bf16.mxu0 0
    %330 = vmatpush1.bf16.msra.mxu0 %v314
    %331 = vmatprep.subr.bf16.mxu0 0
    %332 = vmatpush1.bf16.msra.mxu0 %v313
    %333 = vmatprep.subr.bf16.mxu0 0
    %334 = vmatpush1.bf16.msra.mxu0 %v312
    %335 = vmatprep.subr.bf16.mxu0 0
    %336 = vmatpush1.bf16.msra.mxu0 %v311
    %337 = vmatprep.subr.bf16.mxu0 0
    %338 = vmatpush1.bf16.msra.mxu0 %v310
    %339 = vmatprep.subr.bf16.mxu0 0
    %340 = vmatpush1.bf16.msra.mxu0 %v309
    %341 = vmatprep.subr.bf16.mxu0 0
    %342 = vmatpush2.bf16.msra.mxu0 0
    %343 = vmatprep.subr.bf16.mxu0 0
    %344 = vmatpush2.bf16.msra.mxu0 0
    %345 = vmatprep.subr.bf16.mxu0 0
    %346 = vmatpush2.bf16.msra.mxu0 0
    %347 = vmatprep.subr.bf16.mxu0 0
    %348 = vmatpush2.bf16.msra.mxu0 0
    %349 = vmatprep.subr.bf16.mxu0 0
    %350 = vmatpush2.bf16.msra.mxu0 0
    %351 = vmatprep.subr.bf16.mxu0 0
    %352 = vmatpush2.bf16.msra.mxu0 0
    %353 = vmatprep.subr.bf16.mxu0 0
    %354 = vmatpush2.bf16.msra.mxu0 0
    %355 = vmatprep.subr.bf16.mxu0 0
    %356 = vmatpush2.bf16.msra.mxu0 0
    %357 = vmatprep.mubr.bf16.mxu0 0
    %358 = vmatmul.mubr.bf16.gmra.mxu0 %v253
    %v359 = vpop.f32.mrf.mxu0
    %v360 = vadd.f32 %v275, %v359
    %v361 = vpop.f32.mrf.mxu0
    %v362 = vpop.f32.mrf.mxu0
    %v363 = vpop.f32.mrf.mxu0
    %364 = vdwg.mxu0
    %365 = vst [vmem:[#allocation2] sm:$0xff] %v360
    // Predicated region
    $region30: #{custom_model_forward.1} parent=1 // pred_check
      _
    $region31: #{custom_model_forward.1} parent=1 // pred_check_branch
      %367 = sbr.rel (0) target = $region33
    $region32: #{custom_model_forward.1} parent=1 // pred_region
      %s369 = ssub.s32 128, 128
      %370 = vsyncadd [#allocation3], %s369
      %s372 = sshll.u32 [#allocation2], 4
      %s373 = int_to_ptr.vmem [resolvable:$true] %s372
      %375 = dma.vmem_to_hbm [thread:$0]  %s373, 128, %s7, [#allocation3]
    $region33: #{custom_model_forward.1} parent=1 // pred_fallthru
      _
    // Predicated region
    $region34: #{custom_model_forward.1} parent=1 // pred_check
      _
    $region35: #{custom_model_forward.1} parent=1 // pred_check_branch
      %377 = sbr.rel (0) target = $region37
    $region36: #{custom_model_forward.1} parent=1 // pred_region
      %378 = dma.done [#allocation3], 128
    $region37: #{custom_model_forward.1} parent=1 // pred_fallthru
      _
    %379 = vsyncpa [#allocation3], 1

</llo_original>
